<compile_context>
chip_gen: v5e
topology: v5e:2x2
jax: 0.10.0
libtpu: 0.0.40
codegen_flags: <defaults>
</compile_context>

<pallas_src>
import functools

import jax
import jax.numpy as jnp
from jax.experimental import pallas as pl
from jax.experimental.pallas import tpu as pltpu


def _round_up(x, m):
    return ((x + m - 1) // m) * m


def _tpu_vmem_and_cores():
    """Best-effort per-generation VMEM capacity / core count / MXU row alignment."""
    kind = ""
    try:
        kind = jax.devices()[0].device_kind.lower()
    except Exception:
        pass
    vmem_cap = None
    try:
        info = pltpu.get_tpu_info()
        cap = getattr(info, "vmem_capacity_bytes", None)
        vmem_cap = int(cap) if cap else None
    except Exception:
        vmem_cap = None
    if vmem_cap is None:
        if "v7" in kind:
            vmem_cap = 64 * 1024 * 1024          # v7x: 64 MiB per TensorCore
        elif "v5" in kind or "v6" in kind:
            vmem_cap = 128 * 1024 * 1024         # v5e / v6e: 128 MiB
        else:
            vmem_cap = 64 * 1024 * 1024          # conservative default
    num_cores = 2 if "v7" in kind else 1         # v7x: 2 TCs/chip share the grid
    tm_align = 256 if ("v6" in kind or "v7" in kind) else 128
    return vmem_cap, num_cores, tm_align


def _layer_norm_rows(z, gamma, beta, eps):
    """(z - mu) / (unbiased std + eps) * gamma + beta, all in f32."""
    d = z.shape[-1]
    mu = jnp.mean(z, axis=-1, keepdims=True)
    diff = z - mu
    var = jnp.sum(diff * diff, axis=-1, keepdims=True) / float(max(d - 1, 1))
    sigma = jnp.sqrt(var)
    inv = pl.reciprocal(sigma + eps, approx=True)   # EUP slot -> effectively free
    return diff * inv * gamma + beta


def _ffn_kernel_fused(x_ref, w1_ref, b1_ref, w2_ref, b2_ref, g_ref, beta_ref,
                      o_ref, *, eps: float, apply_ln: bool):
    """num_k == 1 fast path: weights fully resident, no accumulator scratch."""
    x = x_ref[...]
    h = jnp.dot(x, w1_ref[...], preferred_element_type=jnp.float32)
    h = jnp.maximum(h + b1_ref[...].astype(jnp.float32), 0.0)
    z = jnp.dot(h.astype(x.dtype), w2_ref[...], preferred_element_type=jnp.float32)
    z = z + b2_ref[...].astype(jnp.float32) + x.astype(jnp.float32)
    if apply_ln:
        z = _layer_norm_rows(z, g_ref[...].astype(jnp.float32),
                             beta_ref[...].astype(jnp.float32), eps)
    o_ref[...] = z.astype(o_ref.dtype)


def _ffn_kernel_chunked(x_ref, w1_ref, b1_ref, w2_ref, b2_ref, g_ref, beta_ref,
                        o_ref, acc_ref, *, eps: float, apply_ln: bool):
    """d_inner streamed in chunks along an 'arbitrary' grid axis; f32 accumulator."""
    k = pl.program_id(1)

    @pl.when(k == 0)
    def _init():
        acc_ref[...] = jnp.zeros_like(acc_ref)

    x = x_ref[...]
    h = jnp.dot(x, w1_ref[...], preferred_element_type=jnp.float32)
    h = jnp.maximum(h + b1_ref[...].astype(jnp.float32), 0.0)
    acc_ref[...] += jnp.dot(h.astype(x.dtype), w2_ref[...],
                            preferred_element_type=jnp.float32)

    @pl.when(k == pl.num_programs(1) - 1)
    def _finalize():
        z = (acc_ref[...] + b2_ref[...].astype(jnp.float32)
             + x_ref[...].astype(jnp.float32))
        if apply_ln:
            z = _layer_norm_rows(z, g_ref[...].astype(jnp.float32),
                                 beta_ref[...].astype(jnp.float32), eps)
        o_ref[...] = z.astype(o_ref.dtype)


def positionwise_feed_forward(x, w1, b1, w2, b2, gamma, beta, *,
                              eps=1e-3, token_tile=None, inner_tile=None,
                              vmem_budget_bytes=None):
    """x: (B, L, d_hid). w1: (d_hid, d_inner), w2: (d_inner, d_hid)."""
    B, L, d_hid = x.shape
    d_inner = w1.shape[1]
    apply_ln = (L != 1)  # mirror `if z.size(1) == 1: return z`

    N = B * L
    x2d = x.reshape(N, d_hid)
    dbytes = x.dtype.itemsize
    wbytes = w1.dtype.itemsize

    vmem_cap, num_cores, tm_align = _tpu_vmem_and_cores()
    if vmem_budget_bytes is None:
        # ~83 MiB on 128 MiB chips (v5e/v6e), ~41 MiB on v7x (headroom below 64 MiB)
        vmem_budget_bytes = int(vmem_cap * 0.65)
    vmem_limit_cap = min(int(vmem_cap * 0.85), vmem_cap - 8 * 1024 * 1024)

    pack = 16 if dbytes == 2 else 8   # bf16 vregs pack (16,128)
    lane = 128

    def est_vmem(tm, tk, nk):
        wt = 2 * (d_hid * tk + tk * d_hid + tk + 3 * d_hid) * wbytes  # dbl-buffered weights/biases
        io = 2 * 2 * tm * d_hid * dbytes                              # x & out tiles, dbl-buffered
        hb = tm * tk * (4 + dbytes)                                   # f32 h chunk + cast copy
        acc = tm * d_hid * 4 if nk > 1 else 0                         # f32 accumulator scratch
        epi = 4 * tm * d_hid * 4                                      # LN epilogue f32 temporaries
        return wt + io + hb + acc + epi

    # ---- token tile: as large as possible, MXU-row aligned ----
    if token_tile is None:
        token_tile = 512
    TM_cap = _round_up(N, pack)
    TM = min(_round_up(token_tile, pack), TM_cap)
    if TM >= tm_align:
        TM = (TM // tm_align) * tm_align
    TM = max(pack, (TM // pack) * pack)
    TM_min = max(pack, min(tm_align, TM))

    def _halve_tm(tm):
        nxt = tm // 2
        if nxt >= tm_align:
            nxt = (nxt // tm_align) * tm_align
        else:
            nxt = (nxt // pack) * pack
        return max(TM_min, nxt)

    # ---- weight residency (num_k == 1) vs d_inner chunking ----
    resident_possible = (inner_tile is None or inner_tile >= d_inner)
    if resident_possible and est_vmem(TM_min, d_inner, 1) <= vmem_budget_bytes:
        TK = d_inner_pad = d_inner
        num_k = 1
        while TM > TM_min and est_vmem(TM, TK, 1) > vmem_budget_bytes:
            TM = _halve_tm(TM)
    else:
        d_inner_pad = _round_up(d_inner, lane)
        TK = d_inner_pad if inner_tile is None else min(_round_up(inner_tile, lane),
                                                        d_inner_pad)
        # Chunking is unavoidable: shrink TK first (keeps TM big -> fewer weight
        # re-streams, since weight HBM traffic scales with N/TM), then TM.
        while TK > lane and est_vmem(TM, TK, 2) > vmem_budget_bytes:
            TK = max(lane, ((TK // 2) // lane) * lane)
        while TM > TM_min and est_vmem(TM, TK, 2) > vmem_budget_bytes:
            TM = _halve_tm(TM)
        d_inner_pad = _round_up(d_inner, TK)
        num_k = d_inner_pad // TK
        if num_k == 1:
            TK = d_inner_pad

    # v7x: make sure the 'parallel' token axis has >= 2 tiles to feed both TCs.
    if num_cores >= 2:
        while _round_up(N, TM) // TM < num_cores and TM > pack:
            TM = max(pack, _round_up(max(TM // 2, 1), pack))

    # ---- pad operands to the chosen tiles ----
    if d_inner_pad != d_inner:
        w1 = jnp.pad(w1, ((0, 0), (0, d_inner_pad - d_inner)))
        b1 = jnp.pad(b1, ((0, d_inner_pad - d_inner),))
        w2 = jnp.pad(w2, ((0, d_inner_pad - d_inner), (0, 0)))

    N_pad = _round_up(N, TM)
    if N_pad != N:
        x2d = jnp.pad(x2d, ((0, N_pad - N), (0, 0)))
    num_m = N_pad // TM

    b1_2d = b1.reshape(1, d_inner_pad)
    b2_2d = b2.reshape(1, d_hid)
    g_2d = gamma.reshape(1, d_hid)
    beta_2d = beta.reshape(1, d_hid)

    # ---- advisory cost estimate (real weight traffic) ----
    flops = 4 * N_pad * d_hid * d_inner_pad
    weight_bytes = (2 * d_hid * d_inner_pad + d_inner_pad + 3 * d_hid) * wbytes
    weight_streams = 1 if num_k == 1 else num_m
    bytes_accessed = 2 * N_pad * d_hid * dbytes + weight_streams * weight_bytes
    transcendentals = 2 * N_pad if apply_ln else 0
    cost = pl.CostEstimate(flops=int(flops), transcendentals=int(transcendentals),
                           bytes_accessed=int(bytes_accessed))

    est = est_vmem(TM, TK, num_k)
    vmem_limit = int(min(max(est + est // 2, 32 * 1024 * 1024), vmem_limit_cap))

    if num_k == 1:
        kernel = functools.partial(_ffn_kernel_fused, eps=eps, apply_ln=apply_ln)
        grid = (num_m,)
        in_specs = [
            pl.BlockSpec((TM, d_hid), lambda i: (i, 0)),            # x tile
            pl.BlockSpec((d_hid, d_inner_pad), lambda i: (0, 0)),   # W1 (resident)
            pl.BlockSpec((1, d_inner_pad), lambda i: (0, 0)),       # b1
            pl.BlockSpec((d_inner_pad, d_hid), lambda i: (0, 0)),   # W2 (resident)
            pl.BlockSpec((1, d_hid), lambda i: (0, 0)),             # b2
            pl.BlockSpec((1, d_hid), lambda i: (0, 0)),             # gamma (a_2)
            pl.BlockSpec((1, d_hid), lambda i: (0, 0)),             # beta  (b_2)
        ]
        out_specs = pl.BlockSpec((TM, d_hid), lambda i: (i, 0))
        scratch_shapes = []
        dim_sem = ("parallel",)
    else:
        kernel = functools.partial(_ffn_kernel_chunked, eps=eps, apply_ln=apply_ln)
        grid = (num_m, num_k)
        in_specs = [
            pl.BlockSpec((TM, d_hid), lambda i, k: (i, 0)),         # x tile (resident over k)
            pl.BlockSpec((d_hid, TK), lambda i, k: (0, k)),         # W1 chunk
            pl.BlockSpec((1, TK), lambda i, k: (0, k)),             # b1 chunk
            pl.BlockSpec((TK, d_hid), lambda i, k: (k, 0)),         # W2 chunk
            pl.BlockSpec((1, d_hid), lambda i, k: (0, 0)),          # b2
            pl.BlockSpec((1, d_hid), lambda i, k: (0, 0)),          # gamma (a_2)
            pl.BlockSpec((1, d_hid), lambda i, k: (0, 0)),          # beta  (b_2)
        ]
        out_specs = pl.BlockSpec((TM, d_hid), lambda i, k: (i, 0))
        scratch_shapes = [pltpu.VMEM((TM, d_hid), jnp.float32)]     # f32 accumulator
        dim_sem = ("parallel", "arbitrary")

    out2d = pl.pallas_call(
        kernel,
        out_shape=jax.ShapeDtypeStruct((N_pad, d_hid), x.dtype),
        grid=grid,
        in_specs=in_specs,
        out_specs=out_specs,
        scratch_shapes=scratch_shapes,
        compiler_params=pltpu.CompilerParams(
            dimension_semantics=dim_sem,
            vmem_limit_bytes=vmem_limit),
        cost_estimate=cost,
    )(x2d, w1, b1_2d, w2, b2_2d, g_2d, beta_2d)

    return out2d[:N].reshape(B, L, d_hid)


def _reference(x, w1, b1, w2, b2, gamma, beta, eps=1e-3):
    # pure-JAX reference mirroring the PyTorch module (eval mode)
    h = jnp.maximum(jnp.einsum("bld,df->blf", x, w1) + b1, 0.0)
    z = jnp.einsum("blf,fd->bld", h, w2) + b2 + x
    if z.shape[1] == 1:
        return z
    mu = jnp.mean(z, axis=-1, keepdims=True)
    sigma = jnp.std(z, axis=-1, keepdims=True, ddof=1)  # torch.std is unbiased
    return (z - mu) / (sigma + eps) * gamma + beta


if __name__ == "__main__":
    def run_case(B, L, d_hid, d_inner, **kw):
        key = jax.random.PRNGKey(0)
        kx, k1, kb1, k2, kb2 = jax.random.split(key, 5)

        x = jax.random.normal(kx, (B, L, d_hid), dtype=jnp.float32)
        # PyTorch Conv1d weight is (out, in, 1); we store the transposed dense form.
        w1 = jax.random.normal(k1, (d_hid, d_inner), dtype=jnp.float32) * 0.1
        b1 = jax.random.normal(kb1, (d_inner,), dtype=jnp.float32) * 0.1
        w2 = jax.random.normal(k2, (d_inner, d_hid), dtype=jnp.float32) * 0.1
        b2 = jax.random.normal(kb2, (d_hid,), dtype=jnp.float32) * 0.1
        gamma = jnp.ones((d_hid,), dtype=jnp.float32)   # LayerNormalization.a_2
        beta = jnp.zeros((d_hid,), dtype=jnp.float32)   # LayerNormalization.b_2

        out = positionwise_feed_forward(x, w1, b1, w2, b2, gamma, beta, **kw)
        out = jax.block_until_ready(out)
        ref = _reference(x, w1, b1, w2, b2, gamma, beta)
        assert out.shape == (B, L, d_hid)
        assert jnp.allclose(out, ref, atol=2e-3, rtol=2e-3), "mismatch vs reference"

    # Toy shapes from the module: weight-resident single-chunk fast path.
    run_case(2, 8, 32, 64)
    # Exercise the d_inner reduction axis / f32 accumulator path (2 chunks).
    run_case(2, 8, 32, 256, inner_tile=128)
    # Sequence length 1: LayerNormalization early-return (no norm applied).
    run_case(2, 1, 32, 64)

    print("KERNEL_OK")
</pallas_src>

<mosaic_0001>
module attributes {stable_mosaic.version = 11 : i64} {
  func.func @_ffn_kernel_fused(%arg0: i32, %arg1: memref<16x32xf32, #tpu.memory_space<vmem>>, %arg2: memref<32x64xf32, #tpu.memory_space<vmem>>, %arg3: memref<1x64xf32, #tpu.memory_space<vmem>>, %arg4: memref<64x32xf32, #tpu.memory_space<vmem>>, %arg5: memref<1x32xf32, #tpu.memory_space<vmem>>, %arg6: memref<1x32xf32, #tpu.memory_space<vmem>>, %arg7: memref<1x32xf32, #tpu.memory_space<vmem>>, %arg8: memref<16x32xf32, #tpu.memory_space<vmem>>) attributes {dimension_semantics = [#tpu.dimension_semantics<parallel>], iteration_bounds = array<i64: 1>, scalar_prefetch = 0 : i64, scratch_operands = 0 : i64, tpu.core_type = #tpu.core_type<tc>, window_params = [{transform_indices = @transform_0, window_bounds = array<i64: 16, 32>}, {pipeline_mode = #tpu.pipeline_mode<synchronous>, transform_indices = @transform_1, window_bounds = array<i64: 32, 64>}, {pipeline_mode = #tpu.pipeline_mode<synchronous>, transform_indices = @transform_2, window_bounds = array<i64: 1, 64>}, {pipeline_mode = #tpu.pipeline_mode<synchronous>, transform_indices = @transform_3, window_bounds = array<i64: 64, 32>}, {pipeline_mode = #tpu.pipeline_mode<synchronous>, transform_indices = @transform_4, window_bounds = array<i64: 1, 32>}, {pipeline_mode = #tpu.pipeline_mode<synchronous>, transform_indices = @transform_5, window_bounds = array<i64: 1, 32>}, {pipeline_mode = #tpu.pipeline_mode<synchronous>, transform_indices = @transform_6, window_bounds = array<i64: 1, 32>}, {transform_indices = @transform_7, window_bounds = array<i64: 16, 32>}]} {
    %c0 = arith.constant 0 : index
    %c0_0 = arith.constant 0 : index
    %0 = vector.load %arg1[%c0, %c0_0] : memref<16x32xf32, #tpu.memory_space<vmem>>, vector<16x32xf32>
    %c0_1 = arith.constant 0 : index
    %c0_2 = arith.constant 0 : index
    %1 = vector.load %arg2[%c0_1, %c0_2] : memref<32x64xf32, #tpu.memory_space<vmem>>, vector<32x64xf32>
    %cst = arith.constant dense<0.000000e+00> : vector<16x64xf32>
    %2 = tpu.matmul %0, %1, %cst {dimension_numbers = #tpu.dot_dimension_numbers<[1], [0], [0], [1], [0, 0, 1, 1], [], []>} : vector<16x32xf32>, vector<32x64xf32>, vector<16x64xf32> -> vector<16x64xf32>
    %c0_3 = arith.constant 0 : index
    %c0_4 = arith.constant 0 : index
    %3 = vector.load %arg3[%c0_3, %c0_4] : memref<1x64xf32, #tpu.memory_space<vmem>>, vector<1x64xf32>
    %4 = vector.broadcast %3 : vector<1x64xf32> to vector<16x64xf32>
    %5 = arith.addf %2, %4 : vector<16x64xf32>
    %cst_5 = arith.constant 0.000000e+00 : f32
    %6 = vector.broadcast %cst_5 : f32 to vector<16x64xf32>
    %7 = arith.maximumf %5, %6 : vector<16x64xf32>
    %c0_6 = arith.constant 0 : index
    %c0_7 = arith.constant 0 : index
    %8 = vector.load %arg4[%c0_6, %c0_7] : memref<64x32xf32, #tpu.memory_space<vmem>>, vector<64x32xf32>
    %cst_8 = arith.constant dense<0.000000e+00> : vector<16x32xf32>
    %9 = tpu.matmul %7, %8, %cst_8 {dimension_numbers = #tpu.dot_dimension_numbers<[1], [0], [0], [1], [0, 0, 1, 1], [], []>} : vector<16x64xf32>, vector<64x32xf32>, vector<16x32xf32> -> vector<16x32xf32>
    %c0_9 = arith.constant 0 : index
    %c0_10 = arith.constant 0 : index
    %10 = vector.load %arg5[%c0_9, %c0_10] : memref<1x32xf32, #tpu.memory_space<vmem>>, vector<1x32xf32>
    %11 = vector.broadcast %10 : vector<1x32xf32> to vector<16x32xf32>
    %12 = arith.addf %9, %11 : vector<16x32xf32>
    %13 = arith.addf %12, %0 : vector<16x32xf32>
    %c0_11 = arith.constant 0 : index
    %c0_12 = arith.constant 0 : index
    %14 = vector.load %arg6[%c0_11, %c0_12] : memref<1x32xf32, #tpu.memory_space<vmem>>, vector<1x32xf32>
    %c0_13 = arith.constant 0 : index
    %c0_14 = arith.constant 0 : index
    %15 = vector.load %arg7[%c0_13, %c0_14] : memref<1x32xf32, #tpu.memory_space<vmem>>, vector<1x32xf32>
    %cst_15 = arith.constant dense<0.000000e+00> : vector<16xf32>
    %16 = vector.multi_reduction <add>, %13, %cst_15 [1] : vector<16x32xf32> to vector<16xf32>
    %17 = vector.shape_cast %16 : vector<16xf32> to vector<16x1xf32>
    %cst_16 = arith.constant 3.200000e+01 : f32
    %18 = vector.broadcast %cst_16 : f32 to vector<16x1xf32>
    %19 = arith.divf %17, %18 : vector<16x1xf32>
    %20 = vector.broadcast %19 : vector<16x1xf32> to vector<16x32xf32>
    %21 = arith.subf %13, %20 : vector<16x32xf32>
    %22 = arith.mulf %21, %21 : vector<16x32xf32>
    %cst_17 = arith.constant dense<0.000000e+00> : vector<16xf32>
    %23 = vector.multi_reduction <add>, %22, %cst_17 [1] : vector<16x32xf32> to vector<16xf32>
    %24 = vector.shape_cast %23 : vector<16xf32> to vector<16x1xf32>
    %cst_18 = arith.constant 3.100000e+01 : f32
    %25 = vector.broadcast %cst_18 : f32 to vector<16x1xf32>
    %26 = arith.divf %24, %25 : vector<16x1xf32>
    %27 = math.sqrt %26 : vector<16x1xf32>
    %cst_19 = arith.constant 1.000000e-03 : f32
    %28 = vector.broadcast %cst_19 : f32 to vector<16x1xf32>
    %29 = arith.addf %27, %28 : vector<16x1xf32>
    %30 = tpu.reciprocal %29 {approx = true} : vector<16x1xf32> -> vector<16x1xf32>
    %31 = vector.broadcast %30 : vector<16x1xf32> to vector<16x32xf32>
    %32 = arith.mulf %21, %31 : vector<16x32xf32>
    %33 = vector.broadcast %14 : vector<1x32xf32> to vector<16x32xf32>
    %34 = arith.mulf %32, %33 : vector<16x32xf32>
    %35 = vector.broadcast %15 : vector<1x32xf32> to vector<16x32xf32>
    %36 = arith.addf %34, %35 : vector<16x32xf32>
    %c0_20 = arith.constant 0 : index
    %c0_21 = arith.constant 0 : index
    %37 = vector.load %arg8[%c0_20, %c0_21] : memref<16x32xf32, #tpu.memory_space<vmem>>, vector<16x32xf32>
    tpu.vector_store %arg8[%c0_20, %c0_21], %36 {strides = array<i32>} : memref<16x32xf32, #tpu.memory_space<vmem>>, vector<16x32xf32>,
    return
  }
  func.func @transform_0(%arg0: i32) -> (i32, i32) {
    %c0_i32 = arith.constant 0 : i32
    %c0_i32_0 = arith.constant 0 : i32
    return %arg0, %c0_i32 : i32, i32
  }
  func.func @transform_1(%arg0: i32) -> (i32, i32) {
    %c0_i32 = arith.constant 0 : i32
    %c0_i32_0 = arith.constant 0 : i32
    %c0_i32_1 = arith.constant 0 : i32
    return %c0_i32, %c0_i32_0 : i32, i32
  }
  func.func @transform_2(%arg0: i32) -> (i32, i32) {
    %c0_i32 = arith.constant 0 : i32
    %c0_i32_0 = arith.constant 0 : i32
    %c0_i32_1 = arith.constant 0 : i32
    return %c0_i32, %c0_i32_0 : i32, i32
  }
  func.func @transform_3(%arg0: i32) -> (i32, i32) {
    %c0_i32 = arith.constant 0 : i32
    %c0_i32_0 = arith.constant 0 : i32
    %c0_i32_1 = arith.constant 0 : i32
    return %c0_i32, %c0_i32_0 : i32, i32
  }
  func.func @transform_4(%arg0: i32) -> (i32, i32) {
    %c0_i32 = arith.constant 0 : i32
    %c0_i32_0 = arith.constant 0 : i32
    %c0_i32_1 = arith.constant 0 : i32
    return %c0_i32, %c0_i32_0 : i32, i32
  }
  func.func @transform_5(%arg0: i32) -> (i32, i32) {
    %c0_i32 = arith.constant 0 : i32
    %c0_i32_0 = arith.constant 0 : i32
    %c0_i32_1 = arith.constant 0 : i32
    return %c0_i32, %c0_i32_0 : i32, i32
  }
  func.func @transform_6(%arg0: i32) -> (i32, i32) {
    %c0_i32 = arith.constant 0 : i32
    %c0_i32_0 = arith.constant 0 : i32
    %c0_i32_1 = arith.constant 0 : i32
    return %c0_i32, %c0_i32_0 : i32, i32
  }
  func.func @transform_7(%arg0: i32) -> (i32, i32) {
    %c0_i32 = arith.constant 0 : i32
    %c0_i32_0 = arith.constant 0 : i32
    return %arg0, %c0_i32 : i32, i32
  }
}

</mosaic_0001>

<llo_original>
// kernel: tpu_custom_call.1
$region0: #{tpu_custom_call.1}
  #allocation0 [shape = 'u32[]', space=smem, size = 0x4, offset = 0x4, fixed_abs, tag = 'smem constant byte address 0x4 - core index']
  #allocation1 [shape = 'u32[72,128]{1,0:T(1,128)}', space=vmem, size = 0x9000, scoped, tag = 'internal scratch']
  %s0 = inlined_call_operand.vmem [shape: f32[16,32], index: 0, kind: input, shape index: {}]
  %s1 = inlined_call_operand.vmem [shape: f32[32,64], index: 1, kind: input, shape index: {}]
  %s2 = inlined_call_operand.vmem [shape: f32[1,64], index: 2, kind: input, shape index: {}]
  %s3 = inlined_call_operand.vmem [shape: f32[64,32], index: 3, kind: input, shape index: {}]
  %s4 = inlined_call_operand.vmem [shape: f32[1,32], index: 4, kind: input, shape index: {}]
  %s5 = inlined_call_operand.vmem [shape: f32[1,32], index: 5, kind: input, shape index: {}]
  %s6 = inlined_call_operand.vmem [shape: f32[1,32], index: 6, kind: input, shape index: {}]
  %s7 = inlined_call_operand.hbm [shape: f32[16,32], index: 7, kind: output, shape index: {}]
  %s8 = sld [smem:[#allocation0]]
  $region38: #{tpu_custom_call.1} parent=0
    _
  %s10 = ssub.s32 1, %s8
  %s11 = scalar_select 0, %s10, %s8
  $region1: #{tpu_custom_call.1} parent=0
    #allocation2 [shape = 'u8[8192]{0}', space=vmem, size = 0x2000, scoped, tag = 'output window, operand 0, single buffered']
    #allocation3 [shape = 's32[1]{0}', space=sflag, size = 0x4, scoped, tag = 'scoped memory for tpu_custom_call.1']
    %12 = vsyncpa [#allocation3], 0
    // Predicated region
    $region2: #{tpu_custom_call.1} parent=1 // pred_check
      _
    $region3: #{tpu_custom_call.1} parent=1 // pred_check_branch
      %14 = sbr.rel (0) target = $region5
    $region4: #{tpu_custom_call.1} parent=1 // pred_region
      _
    $region5: #{tpu_custom_call.1} parent=1 // pred_fallthru
      _
    // Predicated region
    $region6: #{tpu_custom_call.1} parent=1 // pred_check
      _
    $region7: #{tpu_custom_call.1} parent=1 // pred_check_branch
      %16 = sbr.rel (0) target = $region9
    $region8: #{tpu_custom_call.1} parent=1 // pred_region
      _
    $region9: #{tpu_custom_call.1} parent=1 // pred_fallthru
      _
    // Predicated region
    $region10: #{tpu_custom_call.1} parent=1 // pred_check
      _
    $region11: #{tpu_custom_call.1} parent=1 // pred_check_branch
      %18 = sbr.rel (0) target = $region13
    $region12: #{tpu_custom_call.1} parent=1 // pred_region
      _
    $region13: #{tpu_custom_call.1} parent=1 // pred_fallthru
      _
    // Predicated region
    $region14: #{tpu_custom_call.1} parent=1 // pred_check
      _
    $region15: #{tpu_custom_call.1} parent=1 // pred_check_branch
      %20 = sbr.rel (0) target = $region17
    $region16: #{tpu_custom_call.1} parent=1 // pred_region
      _
    $region17: #{tpu_custom_call.1} parent=1 // pred_fallthru
      _
    // Predicated region
    $region18: #{tpu_custom_call.1} parent=1 // pred_check
      _
    $region19: #{tpu_custom_call.1} parent=1 // pred_check_branch
      %22 = sbr.rel (0) target = $region21
    $region20: #{tpu_custom_call.1} parent=1 // pred_region
      _
    $region21: #{tpu_custom_call.1} parent=1 // pred_fallthru
      _
    // Predicated region
    $region22: #{tpu_custom_call.1} parent=1 // pred_check
      _
    $region23: #{tpu_custom_call.1} parent=1 // pred_check_branch
      %24 = sbr.rel (0) target = $region25
    $region24: #{tpu_custom_call.1} parent=1 // pred_region
      _
    $region25: #{tpu_custom_call.1} parent=1 // pred_fallthru
      _
    // Predicated region
    $region26: #{tpu_custom_call.1} parent=1 // pred_check
      _
    $region27: #{tpu_custom_call.1} parent=1 // pred_check_branch
      %26 = sbr.rel (0) target = $region29
    $region28: #{tpu_custom_call.1} parent=1 // pred_region
      _
    $region29: #{tpu_custom_call.1} parent=1 // pred_fallthru
      _
    %v27 = vld [vmem:[%s0] sm:$0xff]
    %v28 = vld [vmem:[%s0 + $0x8] sm:$0xff]
    %v29 = vld [vmem:[%s1] sm:$0xff]
    %v30 = vld [vmem:[%s1 + $0x8] sm:$0xff]
    %v31 = vld [vmem:[%s1 + $0x10] sm:$0xff]
    %v32 = vld [vmem:[%s1 + $0x18] sm:$0xff]
    %v33 = vld [vmem:[%s2] sm:$0x1]
    %v35 = vperm.slane %v33, 0
    %vm37 = vcmask 261120
    %v39 = vsel %vm37, %v27, 0
    %v42 = vsel %vm37, %v28, 0
    %44 = vmatpush.msra.mxu0 0.0
    %45 = vmatpush.msra.mxu0 0.0
    %46 = vmatpush.msra.mxu0 0.0
    %47 = vmatpush.msra.mxu0 0.0
    %48 = vmatpush.msra.mxu0 0.0
    %49 = vmatpush.msra.mxu0 0.0
    %50 = vmatpush.msra.mxu0 0.0
    %51 = vmatpush.msra.mxu0 0.0
    %52 = vmatpush.msra.mxu0 0.0
    %53 = vmatpush.msra.mxu0 0.0
    %54 = vmatpush.msra.mxu0 0.0
    %55 = vmatpush.msra.mxu0 0.0
    %56 = vmatpush.msra.mxu0 %v32
    %57 = vmatpush.msra.mxu0 %v31
    %58 = vmatpush.msra.mxu0 %v30
    %59 = vmatpush.msra.mxu0 %v29
    %60 = vmatmul.f32.gmra.mxu0 %v39
    %v61 = vpop.f32.mrf.mxu0
    %v62 = vadd.f32 %v35, %v61
    %63 = vmatmul.f32.gmra.mxu0 %v42
    %v64 = vpop.f32.mrf.mxu0
    %v65 = vadd.f32 %v35, %v64
    %66 = vdwg.mxu0
    %v67 = vmax.f32 %v62, 0.0
    %v68 = vmax.f32 %v65, 0.0
    %v69 = vld [vmem:[%s3] sm:$0xff]
    %v70 = vld [vmem:[%s3 + $0x8] sm:$0xff]
    %v71 = vld [vmem:[%s3 + $0x10] sm:$0xff]
    %v72 = vld [vmem:[%s3 + $0x18] sm:$0xff]
    %v73 = vld [vmem:[%s3 + $0x20] sm:$0xff]
    %v74 = vld [vmem:[%s3 + $0x28] sm:$0xff]
    %v75 = vld [vmem:[%s3 + $0x30] sm:$0xff]
    %v76 = vld [vmem:[%s3 + $0x38] sm:$0xff]
    %v77 = vld [vmem:[%s4] sm:$0x1]
    %v79 = vperm.slane %v77, 0
    %vm81 = vcmask 523264
    %v83 = vsel %vm81, %v67, 0
    %v86 = vsel %vm81, %v68, 0
    %88 = vmatpush.msra.mxu0 0.0
    %89 = vmatpush.msra.mxu0 0.0
    %90 = vmatpush.msra.mxu0 0.0
    %91 = vmatpush.msra.mxu0 0.0
    %92 = vmatpush.msra.mxu0 0.0
    %93 = vmatpush.msra.mxu0 0.0
    %94 = vmatpush.msra.mxu0 0.0
    %95 = vmatpush.msra.mxu0 0.0
    %96 = vmatpush.msra.mxu0 %v76
    %97 = vmatpush.msra.mxu0 %v75
    %98 = vmatpush.msra.mxu0 %v74
    %99 = vmatpush.msra.mxu0 %v73
    %100 = vmatpush.msra.mxu0 %v72
    %101 = vmatpush.msra.mxu0 %v71
    %102 = vmatpush.msra.mxu0 %v70
    %103 = vmatpush.msra.mxu0 %v69
    %104 = vmatmul.f32.gmra.mxu0 %v83
    %v105 = vpop.f32.mrf.mxu0
    %v106 = vadd.f32 %v79, %v105
    %107 = vmatmul.f32.gmra.mxu0 %v86
    %v108 = vpop.f32.mrf.mxu0
    %v109 = vadd.f32 %v79, %v108
    %110 = vdwg.mxu0
    %v111 = vadd.f32 %v106, %v27
    %v112 = vadd.f32 %v109, %v28
    %v113 = vld [vmem:[%s5] sm:$0x1]
    %v114 = vld [vmem:[%s6] sm:$0x1]
    %v115 = vsel %vm37, %v111, 0.0
    %116 = vadd.xlane.f32.xlu0 %v115
    %v117 = vpop.xlane.xlu0 %116
    %v118 = vsel %vm37, %v112, 0.0
    %119 = vadd.xlane.f32.xlu0 %v118
    %v120 = vpop.xlane.xlu0 %119
    %v121 = vrcp.pop 32.0
    %v122 = vmul.f32 32.0, %v121
    %v123 = vsub.f32 1.0, %v122
    %v124 = vmul.f32 %v121, %v123
    %v125 = vadd.f32 %v121, %v124
    %vm126 = vweird.f32 %v121
    %v127 = vsel %vm126, %v121, %v125
    %v128 = vmul.f32 %v117, %v127
    %v129 = vmul.f32 %v120, %v127
    %v130 = vsub.f32 %v111, %v128
    %v131 = vsub.f32 %v112, %v129
    %v132 = vmul.f32 %v130, %v130
    %v133 = vmul.f32 %v131, %v131
    %v134 = vsel %vm37, %v132, 0.0
    %135 = vadd.xlane.f32.xlu0 %v134
    %v136 = vpop.xlane.xlu0 %135
    %v137 = vsel %vm37, %v133, 0.0
    %138 = vadd.xlane.f32.xlu0 %v137
    %v139 = vpop.xlane.xlu0 %138
    %v140 = vrcp.pop 31.0
    %v141 = vmul.f32 31.0, %v140
    %v142 = vsub.f32 1.0, %v141
    %v143 = vmul.f32 %v140, %v142
    %v144 = vadd.f32 %v140, %v143
    %vm145 = vweird.f32 %v140
    %v146 = vsel %vm145, %v140, %v144
    %v147 = vmul.f32 %v136, %v146
    %v148 = vmul.f32 %v139, %v146
    %v149 = vrsqrt.pop %v147
    %v150 = vmul.f32 %v149, %v147
    %v151 = vmul.f32 %v150, %v149
    %v152 = vmul.f32 0.5, %v151
    %v153 = vsub.f32 1.5, %v152
    %v154 = vmul.f32 %v149, %v153
    %v155 = vmul.f32 %v147, %v154
    %vm156 = vcmp.eq.f32.partialorder %v147, inf
    %v157 = vsel %vm156, %v147, %v155
    %vm158 = vcmp.eq.f32.partialorder %v147, 0.0
    %v159 = vand.u32 %v147, 2147483648
    %v160 = vsel %vm158, %v159, %v157
    %v161 = vrsqrt.pop %v148
    %v162 = vmul.f32 %v161, %v148
    %v163 = vmul.f32 %v162, %v161
    %v164 = vmul.f32 0.5, %v163
    %v165 = vsub.f32 1.5, %v164
    %v166 = vmul.f32 %v161, %v165
    %v167 = vmul.f32 %v148, %v166
    %vm168 = vcmp.eq.f32.partialorder %v148, inf
    %v169 = vsel %vm168, %v148, %v167
    %vm170 = vcmp.eq.f32.partialorder %v148, 0.0
    %v171 = vand.u32 %v148, 2147483648
    %v172 = vsel %vm170, %v171, %v169
    %v173 = vadd.f32 %v160, 0.001
    %v174 = vadd.f32 %v172, 0.001
    %v175 = vrcp.pop %v173
    %v176 = vrcp.pop %v174
    %v177 = vmul.f32 %v130, %v175
    %v178 = vmul.f32 %v131, %v176
    %v180 = vperm.slane %v113, 0
    %v182 = vmul.f32 %v177, %v180
    %v183 = vmul.f32 %v178, %v180
    %v185 = vperm.slane %v114, 0
    %v187 = vadd.f32 %v182, %v185
    %v188 = vadd.f32 %v183, %v185
    %189 = vst.msk [vmem:[#allocation2] sm:$0xff] %vm37, %v187
    %190 = vst.msk [vmem:[#allocation2 + $0x8] sm:$0xff] %vm37, %v188
    // Predicated region
    $region30: #{tpu_custom_call.1} parent=1 // pred_check
      _
    $region31: #{tpu_custom_call.1} parent=1 // pred_check_branch
      %192 = sbr.rel (0) target = $region33
    $region32: #{tpu_custom_call.1} parent=1 // pred_region
      %194 = vsyncadd [#allocation3], 0
      %s195 = sshll.u32 [#allocation2], 4
      %s196 = int_to_ptr.vmem [resolvable:$true] %s195
      %s197 = sshll.u32 %s7, 4
      %s198 = int_to_ptr.hbm [resolvable:$true] %s197
      %203 = dma.vmem_to_hbm [thread:$0]  %s196, 256, %s198, [#allocation3], 128, 128, 8
    $region33: #{tpu_custom_call.1} parent=1 // pred_fallthru
      _
    // Predicated region
    $region34: #{tpu_custom_call.1} parent=1 // pred_check
      _
    $region35: #{tpu_custom_call.1} parent=1 // pred_check_branch
      %205 = sbr.rel (0) target = $region37
    $region36: #{tpu_custom_call.1} parent=1 // pred_region
      %207 = dma.done [#allocation3], 256
    $region37: #{tpu_custom_call.1} parent=1 // pred_fallthru
      _
    %208 = vsyncpa [#allocation3], 1

</llo_original>
